<compile_context>
chip_gen: v5e
topology: v5e:2x2
jax: 0.10.0
libtpu: 0.0.40
codegen_flags: <defaults>
</compile_context>

<pallas_src>
import functools

import jax
import jax.numpy as jnp
from jax import lax
from jax.experimental import pallas as pl
from jax.experimental.pallas import tpu as pltpu

LANES = 128


def _round_up(x, m):
    return (x + m - 1) // m * m


def _device_kind():
    try:
        return jax.devices()[0].device_kind.lower()
    except Exception:
        return ""


def _kernel_config():
    """Return (max_tile_rows, num_core_splits) for the local TPU generation."""
    kind = _device_kind()
    if "v7" in kind:
        # 2 TensorCores/chip; 8192x128xf32 = 4 MiB per input block -> 16 MiB
        # double-buffered, comfortably under 64 MiB physical VMEM now that the
        # accumulator is vreg-sized.  Bigger blocks amortize the ~0.35us
        # per-step overhead against the ~3.2 TB/s HBM stream.
        return 8192, 2
    if "v6" in kind:
        return 8192, 1
    # v5e (and unknown chips): slower HBM, larger tiles buy little; single TC.
    return 4096, 1


def _myloss_kernel(x_ref, t_ref, o_ref, acc_ref, *,
                   rows, tile_rows, blocks_per_split):
    c = pl.program_id(0)      # core-split ("parallel") axis
    i = pl.program_id(1)      # sequential reduction axis

    @pl.when(i == 0)
    def _():
        acc_ref[...] = jnp.zeros_like(acc_ref)

    x = x_ref[...]
    t = t_ref[...]
    if x.dtype != jnp.float32:
        x = x.astype(jnp.float32)
    if t.dtype != jnp.float32:
        t = t.astype(jnp.float32)

    # Elementwise hot path: VPU (mul/add) + EUP/VPU (log).  `1 - t` is hoisted
    # and reused for both the multiply and the log.
    one_minus_t = 1.0 - t
    val = t * jnp.log(x) + one_minus_t * jnp.log(one_minus_t)

    valid_rows = rows - (c * blocks_per_split + i) * tile_rows
    is_full = valid_rows >= tile_rows

    # Interior (full) blocks skip the mask entirely; only the final partial
    # block and clamped idle-split blocks pay for iota + cmp + select.
    @pl.when(is_full)
    def _():
        # (tile_rows, 128) -> (tile_rows//8, 8, 128): pure vreg regrouping,
        # sum over the leading axis is plain VPU adds into a vreg-sized acc.
        acc_ref[...] += val.reshape(tile_rows // 8, 8, LANES).sum(axis=0)

    @pl.when(jnp.logical_not(is_full))
    def _():
        row_ids = lax.broadcasted_iota(jnp.int32, (tile_rows, LANES), 0)
        # Select (NOT a multiplicative mask): rows past the end of the data
        # may hold NaN/Inf garbage which must be discarded, not multiplied.
        masked = jnp.where(row_ids < valid_rows, val, 0.0)
        acc_ref[...] += masked.reshape(tile_rows // 8, 8, LANES).sum(axis=0)

    @pl.when(i == pl.num_programs(1) - 1)
    def _():
        o_ref[0, 0] = jnp.sum(acc_ref[...])   # one cross-lane reduce per split


def _myloss_sum_2d(x2, t2, rows, tile_rows, num_splits):
    """Sum of the per-element loss over a lane-dense (rows, 128) slab."""
    total_blocks = pl.cdiv(rows, tile_rows)
    blocks_per_split = pl.cdiv(total_blocks, num_splits)
    grid = (num_splits, blocks_per_split)

    def in_map(c, i):
        # Clamp so an idle split re-reads a valid block; its contribution is
        # masked out in-kernel (valid_rows <= 0 takes the masked branch).
        return (jnp.minimum(c * blocks_per_split + i, total_blocks - 1), 0)

    kernel = functools.partial(
        _myloss_kernel,
        rows=rows,
        tile_rows=tile_rows,
        blocks_per_split=blocks_per_split,
    )

    partials = pl.pallas_call(
        kernel,
        out_shape=jax.ShapeDtypeStruct((num_splits, 1), jnp.float32),
        grid_spec=pltpu.PrefetchScalarGridSpec(
            num_scalar_prefetch=0,
            grid=grid,
            in_specs=[
                pl.BlockSpec((tile_rows, LANES), in_map),
                pl.BlockSpec((tile_rows, LANES), in_map),
            ],
            out_specs=pl.BlockSpec(
                (1, 1), lambda c, i: (c, 0), memory_space=pltpu.SMEM
            ),
            scratch_shapes=[pltpu.VMEM((8, LANES), jnp.float32)],
        ),
        compiler_params=pltpu.CompilerParams(
            dimension_semantics=("parallel", "arbitrary"),
            vmem_limit_bytes=40 * 1024 * 1024,
        ),
    )(x2, t2)

    return jnp.sum(partials)


def myloss_pallas(inp, tgt):
    """mean(target*log(input) + (1-target)*log(1-target)) over all elements."""
    assert inp.shape == tgt.shape
    total_n = inp.size

    max_tile_rows, num_splits = _kernel_config()

    x_flat = inp.reshape(-1)
    t_flat = tgt.reshape(-1)

    # Split off the (rare) sub-128 tail instead of concatenate-padding the
    # whole array (which would copy both inputs through HBM).
    main_n = (total_n // LANES) * LANES
    rem = total_n - main_n

    total_sum = jnp.float32(0.0)

    if main_n:
        rows = main_n // LANES
        x2 = x_flat[:main_n].reshape(rows, LANES)
        t2 = t_flat[:main_n].reshape(rows, LANES)
        tile_rows = min(max_tile_rows, _round_up(rows, 8))
        total_sum = total_sum + _myloss_sum_2d(
            x2, t2, rows, tile_rows, num_splits)

    if rem:
        # Fewer than 128 elements: negligible, handled in plain JAX.
        xt = x_flat[main_n:].astype(jnp.float32)
        tt = t_flat[main_n:].astype(jnp.float32)
        one_minus_tt = 1.0 - tt
        total_sum = total_sum + jnp.sum(
            tt * jnp.log(xt) + one_minus_tt * jnp.log(one_minus_tt))

    return total_sum / jnp.float32(total_n)


if __name__ == "__main__":
    key = jax.random.PRNGKey(0)
    k1, k2 = jax.random.split(key)
    # small NCHW shapes, values kept strictly inside (0, 1) so logs are finite
    shape = (2, 4, 16, 16)
    inp = jax.random.uniform(k1, shape, jnp.float32, minval=0.05, maxval=0.95)
    tgt = jax.random.uniform(k2, shape, jnp.float32, minval=0.05, maxval=0.95)

    loss = myloss_pallas(inp, tgt)
    jax.block_until_ready(loss)

    # reference check in plain JAX
    ref = jnp.mean(tgt * jnp.log(inp) + (1.0 - tgt) * jnp.log(1.0 - tgt))
    assert jnp.allclose(loss, ref, rtol=1e-5, atol=1e-5), (loss, ref)

    print("KERNEL_OK")
</pallas_src>

<mosaic_0001>
module attributes {stable_mosaic.version = 11 : i64} {
  func.func @_myloss_kernel(%arg0: i32, %arg1: i32, %arg2: memref<16x128xf32, #tpu.memory_space<vmem>>, %arg3: memref<16x128xf32, #tpu.memory_space<vmem>>, %arg4: memref<1x1xf32, #tpu.memory_space<smem>>, %arg5: memref<8x128xf32, #tpu.memory_space<vmem>>) attributes {dimension_semantics = [#tpu.dimension_semantics<parallel>, #tpu.dimension_semantics<arbitrary>], iteration_bounds = array<i64: 1, 1>, scalar_prefetch = 0 : i64, scratch_operands = 1 : i64, tpu.core_type = #tpu.core_type<tc>, window_params = [{transform_indices = @transform_0, window_bounds = array<i64: 16, 128>}, {transform_indices = @transform_1, window_bounds = array<i64: 16, 128>}, {transform_indices = @transform_2, window_bounds = array<i64: 1, 1>}]} {
    %c0_i32 = arith.constant 0 : i32
    %0 = arith.cmpi eq, %arg1, %c0_i32 : i32
    %1 = arith.extui %0 : i1 to i32
    %c0_i32_0 = arith.constant 0 : i32
    %2 = arith.cmpi ne, %1, %c0_i32_0 : i32
    scf.if %2 {
      %cst_10 = arith.constant 0.000000e+00 : f32
      %25 = vector.broadcast %cst_10 : f32 to vector<8x128xf32>
      %c0_11 = arith.constant 0 : index
      %c0_12 = arith.constant 0 : index
      %26 = vector.load %arg5[%c0_11, %c0_12] : memref<8x128xf32, #tpu.memory_space<vmem>>, vector<8x128xf32>
      tpu.vector_store %arg5[%c0_11, %c0_12], %25 {strides = array<i32>} : memref<8x128xf32, #tpu.memory_space<vmem>>, vector<8x128xf32>,
    } else {
    }
    %c0 = arith.constant 0 : index
    %c0_1 = arith.constant 0 : index
    %3 = vector.load %arg2[%c0, %c0_1] : memref<16x128xf32, #tpu.memory_space<vmem>>, vector<16x128xf32>
    %c0_2 = arith.constant 0 : index
    %c0_3 = arith.constant 0 : index
    %4 = vector.load %arg3[%c0_2, %c0_3] : memref<16x128xf32, #tpu.memory_space<vmem>>, vector<16x128xf32>
    %cst = arith.constant 1.000000e+00 : f32
    %5 = vector.broadcast %cst : f32 to vector<16x128xf32>
    %6 = arith.subf %5, %4 : vector<16x128xf32>
    %7 = math.log %3 : vector<16x128xf32>
    %8 = arith.mulf %4, %7 : vector<16x128xf32>
    %9 = math.log %6 : vector<16x128xf32>
    %10 = arith.mulf %6, %9 : vector<16x128xf32>
    %11 = arith.addf %8, %10 : vector<16x128xf32>
    %c1_i32 = arith.constant 1 : i32
    %12 = arith.muli %arg0, %c1_i32 : i32
    %13 = arith.addi %12, %arg1 : i32
    %c16_i32 = arith.constant 16 : i32
    %14 = arith.muli %13, %c16_i32 : i32
    %c16_i32_4 = arith.constant 16 : i32
    %15 = arith.subi %c16_i32_4, %14 : i32
    %c16_i32_5 = arith.constant 16 : i32
    %16 = arith.cmpi sge, %15, %c16_i32_5 : i32
    %17 = arith.extui %16 : i1 to i32
    %c0_i32_6 = arith.constant 0 : i32
    %18 = arith.cmpi ne, %17, %c0_i32_6 : i32
    scf.if %18 {
      %c0_10 = arith.constant 0 : index
      %c0_11 = arith.constant 0 : index
      %25 = vector.load %arg5[%c0_10, %c0_11] : memref<8x128xf32, #tpu.memory_space<vmem>>, vector<8x128xf32>
      %26 = vector.shape_cast %11 : vector<16x128xf32> to vector<2x8x128xf32>
      %cst_12 = arith.constant dense<0.000000e+00> : vector<8x128xf32>
      %27 = vector.multi_reduction <add>, %26, %cst_12 [0] : vector<2x8x128xf32> to vector<8x128xf32>
      %28 = arith.addf %25, %27 : vector<8x128xf32>
      %c0_13 = arith.constant 0 : index
      %c0_14 = arith.constant 0 : index
      %29 = vector.load %arg5[%c0_13, %c0_14] : memref<8x128xf32, #tpu.memory_space<vmem>>, vector<8x128xf32>
      tpu.vector_store %arg5[%c0_13, %c0_14], %28 {strides = array<i32>} : memref<8x128xf32, #tpu.memory_space<vmem>>, vector<8x128xf32>,
    } else {
    }
    %true = arith.constant true
    %19 = arith.xori %16, %true : i1
    %20 = arith.extui %19 : i1 to i32
    %c0_i32_7 = arith.constant 0 : i32
    %21 = arith.cmpi ne, %20, %c0_i32_7 : i32
    scf.if %21 {
      %25 = tpu.iota {dimensions = array<i32: 0>} : vector<16x128xi32>
      %26 = vector.broadcast %15 : i32 to vector<16x128xi32>
      %27 = arith.cmpi slt, %25, %26 : vector<16x128xi32>
      %cst_10 = arith.constant 0.000000e+00 : f32
      %28 = vector.broadcast %cst_10 : f32 to vector<16x128xf32>
      %29 = arith.select %27, %11, %28 : vector<16x128xi1>, vector<16x128xf32>
      %c0_11 = arith.constant 0 : index
      %c0_12 = arith.constant 0 : index
      %30 = vector.load %arg5[%c0_11, %c0_12] : memref<8x128xf32, #tpu.memory_space<vmem>>, vector<8x128xf32>
      %31 = vector.shape_cast %29 : vector<16x128xf32> to vector<2x8x128xf32>
      %cst_13 = arith.constant dense<0.000000e+00> : vector<8x128xf32>
      %32 = vector.multi_reduction <add>, %31, %cst_13 [0] : vector<2x8x128xf32> to vector<8x128xf32>
      %33 = arith.addf %30, %32 : vector<8x128xf32>
      %c0_14 = arith.constant 0 : index
      %c0_15 = arith.constant 0 : index
      %34 = vector.load %arg5[%c0_14, %c0_15] : memref<8x128xf32, #tpu.memory_space<vmem>>, vector<8x128xf32>
      tpu.vector_store %arg5[%c0_14, %c0_15], %33 {strides = array<i32>} : memref<8x128xf32, #tpu.memory_space<vmem>>, vector<8x128xf32>,
    } else {
    }
    %c0_i32_8 = arith.constant 0 : i32
    %22 = arith.cmpi eq, %arg1, %c0_i32_8 : i32
    %23 = arith.extui %22 : i1 to i32
    %c0_i32_9 = arith.constant 0 : i32
    %24 = arith.cmpi ne, %23, %c0_i32_9 : i32
    scf.if %24 {
      %c0_10 = arith.constant 0 : index
      %c0_11 = arith.constant 0 : index
      %25 = vector.load %arg5[%c0_10, %c0_11] : memref<8x128xf32, #tpu.memory_space<vmem>>, vector<8x128xf32>
      %26 = vector.shape_cast %25 : vector<8x128xf32> to vector<1x8x128xf32>
      %cst_12 = arith.constant dense<0.000000e+00> : vector<1xf32>
      %27 = vector.multi_reduction <add>, %26, %cst_12 [1, 2] : vector<1x8x128xf32> to vector<1xf32>
      %28 = vector.shape_cast %27 : vector<1xf32> to vector<1x1x1xf32>
      %29 = vector.extract %28[0, 0, 0] : f32 from vector<1x1x1xf32>
      %c0_13 = arith.constant 0 : index
      %c0_14 = arith.constant 0 : index
      %30 = memref.load %arg4[%c0_13, %c0_14] : memref<1x1xf32, #tpu.memory_space<smem>>
      memref.store %29, %arg4[%c0_13, %c0_14] : memref<1x1xf32, #tpu.memory_space<smem>>
    } else {
    }
    return
  }
  func.func @transform_0(%arg0: i32, %arg1: i32) -> (i32, i32) {
    %c1_i32 = arith.constant 1 : i32
    %0 = arith.muli %arg0, %c1_i32 : i32
    %1 = arith.addi %0, %arg1 : i32
    %c0_i32 = arith.constant 0 : i32
    %2 = arith.minsi %1, %c0_i32 : i32
    %c0_i32_0 = arith.constant 0 : i32
    %c0_i32_1 = arith.constant 0 : i32
    return %2, %c0_i32_0 : i32, i32
  }
  func.func @transform_1(%arg0: i32, %arg1: i32) -> (i32, i32) {
    %c1_i32 = arith.constant 1 : i32
    %0 = arith.muli %arg0, %c1_i32 : i32
    %1 = arith.addi %0, %arg1 : i32
    %c0_i32 = arith.constant 0 : i32
    %2 = arith.minsi %1, %c0_i32 : i32
    %c0_i32_0 = arith.constant 0 : i32
    %c0_i32_1 = arith.constant 0 : i32
    return %2, %c0_i32_0 : i32, i32
  }
  func.func @transform_2(%arg0: i32, %arg1: i32) -> (i32, i32) {
    %c0_i32 = arith.constant 0 : i32
    %c0_i32_0 = arith.constant 0 : i32
    return %arg0, %c0_i32 : i32, i32
  }
}

</mosaic_0001>

<llo_original>
// kernel: tpu_custom_call.1
$region0: #{tpu_custom_call.1}
  #allocation0 [shape = 'u32[]', space=smem, size = 0x4, offset = 0x4, fixed_abs, tag = 'smem constant byte address 0x4 - core index']
  #allocation1 [shape = 'u32[72,128]{1,0:T(1,128)}', space=vmem, size = 0x9000, scoped, tag = 'internal scratch']
  #allocation2 [shape = 'f32[8,128]{1,0:T(8,128)}', space=vmem, size = 0x1000, scoped, tag = 'scratch operand']
  %s0 = inlined_call_operand.hbm [shape: f32[16,128], index: 0, kind: input, shape index: {}]
  %s1 = inlined_call_operand.hbm [shape: f32[16,128], index: 1, kind: input, shape index: {}]
  %s2 = inlined_call_operand.hbm [shape: f32[1,1], index: 2, kind: output, shape index: {}]
  %s3 = sld [smem:[#allocation0]]
  $region42: #{tpu_custom_call.1} parent=0
    _
  %s5 = ssub.s32 1, %s3
  %s6 = scalar_select 0, %s5, %s3
  $region1: #{tpu_custom_call.1} parent=0
    #allocation3 [shape = 'u8[8192]{0}', space=vmem, size = 0x2000, scoped, tag = 'input window, operand 0, single buffered']
    #allocation4 [shape = 's32[1]{0}', space=sflag, size = 0x4, scoped, tag = 'scoped memory for tpu_custom_call.1']
    #allocation5 [shape = 's32[1]{0}', space=sflag, size = 0x4, scoped, tag = 'scoped memory for tpu_custom_call.1']
    #allocation6 [shape = 'u8[8192]{0}', space=vmem, size = 0x2000, scoped, tag = 'input window, operand 1, single buffered']
    #allocation7 [shape = 's32[1]{0}', space=sflag, size = 0x4, scoped, tag = 'scoped memory for tpu_custom_call.1']
    #allocation8 [shape = 'u8[512]{0}', space=smem, size = 0x200, scoped, tag = 'output window, operand 0, single buffered']
    %7 = vsyncpa [#allocation4], 0
    %8 = vsyncpa [#allocation7], 0
    %9 = vsyncpa [#allocation5], 0
    // Predicated region
    $region2: #{tpu_custom_call.1} parent=1 // pred_check
      _
    $region3: #{tpu_custom_call.1} parent=1 // pred_check_branch
      %11 = sbr.rel (0) target = $region5
    $region4: #{tpu_custom_call.1} parent=1 // pred_region
      %s12 = sadd.s32 0, 0
      %p13 = scmp.lt.s32.totalorder %s12, 0
      %s14 = scalar_select %p13, %s12, 0
      %s15 = smul.u32 2, %s14
      %17 = vsyncadd [#allocation4], 0
      %s18 = smul.addr %s15, 8
      %s19 = scalar_lea.hbm %s0, %s18
      %s20 = sshll.u32 %s19, 4
      %s21 = int_to_ptr.hbm [resolvable:$true] %s20
      %s22 = sshll.u32 [#allocation3], 4
      %s23 = int_to_ptr.vmem [resolvable:$true] %s22
      %28 = dma.hbm_to_vmem [thread:$0]  %s21, 256, %s23, [#allocation4], 128, 128, 8
    $region5: #{tpu_custom_call.1} parent=1 // pred_fallthru
      _
    // Predicated region
    $region6: #{tpu_custom_call.1} parent=1 // pred_check
      _
    $region7: #{tpu_custom_call.1} parent=1 // pred_check_branch
      %30 = sbr.rel (0) target = $region9
    $region8: #{tpu_custom_call.1} parent=1 // pred_region
      %s31 = sadd.s32 0, 0
      %p32 = scmp.lt.s32.totalorder %s31, 0
      %s33 = scalar_select %p32, %s31, 0
      %s34 = smul.u32 2, %s33
      %36 = vsyncadd [#allocation7], 0
      %s37 = smul.addr %s34, 8
      %s38 = scalar_lea.hbm %s1, %s37
      %s39 = sshll.u32 %s38, 4
      %s40 = int_to_ptr.hbm [resolvable:$true] %s39
      %s41 = sshll.u32 [#allocation6], 4
      %s42 = int_to_ptr.vmem [resolvable:$true] %s41
      %47 = dma.hbm_to_vmem [thread:$0]  %s40, 256, %s42, [#allocation7], 128, 128, 8
    $region9: #{tpu_custom_call.1} parent=1 // pred_fallthru
      _
    // Predicated region
    $region10: #{tpu_custom_call.1} parent=1 // pred_check
      _
    $region11: #{tpu_custom_call.1} parent=1 // pred_check_branch
      %49 = sbr.rel (0) target = $region13
    $region12: #{tpu_custom_call.1} parent=1 // pred_region
      %51 = dma.done [#allocation4], 256
    $region13: #{tpu_custom_call.1} parent=1 // pred_fallthru
      _
    // Predicated region
    $region14: #{tpu_custom_call.1} parent=1 // pred_check
      _
    $region15: #{tpu_custom_call.1} parent=1 // pred_check_branch
      %53 = sbr.rel (0) target = $region17
    $region16: #{tpu_custom_call.1} parent=1 // pred_region
      %55 = dma.done [#allocation7], 256
    $region17: #{tpu_custom_call.1} parent=1 // pred_fallthru
      _
    %s56 = sadd.s32 0, 0
    %p57 = scmp.lt.s32.totalorder %s56, 0
    %s58 = scalar_select %p57, %s56, 0
    %s59 = smul.u32 2, %s58
    %s60 = sadd.s32 0, 0
    %p61 = scmp.lt.s32.totalorder %s60, 0
    %s62 = scalar_select %p61, %s60, 0
    %s63 = smul.u32 2, %s62
    %p64 = scmp.eq.s32.totalorder 0, 0
    // Predicated region
    $region18: #{tpu_custom_call.1} parent=1 // pred_check
      %p65 = pneg %p64
    $region19: #{tpu_custom_call.1} parent=1 // pred_check_branch
      %67 = sbr.rel (%p65) target = $region21
    $region20: #{tpu_custom_call.1} parent=1 // pred_region
      %68 = vst [vmem:[#allocation2] sm:$0xff] 0.0
    $region21: #{tpu_custom_call.1} parent=1 // pred_fallthru
      _
    %v69 = vld [vmem:[#allocation3] sm:$0xff]
    %v70 = vld [vmem:[#allocation3 + $0x8] sm:$0xff]
    %v71 = vld [vmem:[#allocation6] sm:$0xff]
    %v72 = vld [vmem:[#allocation6 + $0x8] sm:$0xff]
    %v73 = vsub.f32 1.0, %v71
    %v74 = vsub.f32 1.0, %v72
    %v75 = vlog2.pop %v69
    %v76 = vmul.f32 %v75, 0.6931472
    %v77 = vlog2.pop %v70
    %v78 = vmul.f32 %v77, 0.6931472
    %v79 = vmul.f32 %v71, %v76
    %v80 = vmul.f32 %v72, %v78
    %v81 = vlog2.pop %v73
    %v82 = vmul.f32 %v81, 0.6931472
    %v83 = vlog2.pop %v74
    %v84 = vmul.f32 %v83, 0.6931472
    %v85 = vmul.f32 %v73, %v82
    %v86 = vmul.f32 %v74, %v84
    %v87 = vadd.f32 %v79, %v85
    %v88 = vadd.f32 %v80, %v86
    %s89 = sadd.s32 0, 0
    %s90 = smul.u32 %s89, 16
    %s91 = ssub.s32 16, %s90
    %p92 = scmp.ge.s32.totalorder %s91, 16
    // Predicated region
    $region22: #{tpu_custom_call.1} parent=1 // pred_check
      %p93 = pneg %p92
    $region23: #{tpu_custom_call.1} parent=1 // pred_check_branch
      %95 = sbr.rel (%p93) target = $region25
    $region24: #{tpu_custom_call.1} parent=1 // pred_region
      %v96 = vld [vmem:[#allocation2] sm:$0xff]
      %v97 = vadd.f32 %v87, %v88
      %v98 = vadd.f32 %v96, %v97
      %99 = vst [vmem:[#allocation2] sm:$0xff] %v98
    $region25: #{tpu_custom_call.1} parent=1 // pred_fallthru
      _
    %p100 = scmp.lt.s32.totalorder %s91, 16
    // Predicated region
    $region26: #{tpu_custom_call.1} parent=1 // pred_check
      %p101 = pneg %p100
    $region27: #{tpu_custom_call.1} parent=1 // pred_check_branch
      %103 = sbr.rel (%p101) target = $region29
    $region28: #{tpu_custom_call.1} parent=1 // pred_region
      %v104 = vlaneseq
      %v105 = vshrl.u32 %v104, 7
      %v106 = vadd.s32 %v105, 8
      %v107 = vstv %s91
      %vm108 = vcmp.lt.s32.totalorder %v105, %v107
      %vm109 = vcmp.lt.s32.totalorder %v106, %v107
      %v110 = vsel %vm108, %v87, 0.0
      %v111 = vsel %vm109, %v88, 0.0
      %v112 = vld [vmem:[#allocation2] sm:$0xff]
      %v113 = vadd.f32 %v110, %v111
      %v114 = vadd.f32 %v112, %v113
      %115 = vst [vmem:[#allocation2] sm:$0xff] %v114
    $region29: #{tpu_custom_call.1} parent=1 // pred_fallthru
      _
    // Predicated region
    $region30: #{tpu_custom_call.1} parent=1 // pred_check
      %p116 = pneg %p64
    $region31: #{tpu_custom_call.1} parent=1 // pred_check_branch
      %118 = sbr.rel (%p116) target = $region33
    $region32: #{tpu_custom_call.1} parent=1 // pred_region
      %v119 = vld [vmem:[#allocation2] sm:$0xff]
      %120 = vadd.xlane.f32.xlu0 %v119
      %v121 = vpop.xlane.xlu0 %120
      %v122 = vrot.slane %v121, 4
      %v123 = vadd.f32 %v121, %v122
      %v124 = vrot.slane %v123, 2
      %v125 = vadd.f32 %v123, %v124
      %v126 = vrot.slane %v125, 1
      %v127 = vadd.f32 %v125, %v126
      %s128 = vtos %v127
      %s129 = scalar_lea.smem [#allocation8], 0
      %130 = sst [smem:[%s129]] %s128
    $region33: #{tpu_custom_call.1} parent=1 // pred_fallthru
      _
    // Predicated region
    $region34: #{tpu_custom_call.1} parent=1 // pred_check
      _
    $region35: #{tpu_custom_call.1} parent=1 // pred_check_branch
      %132 = sbr.rel (0) target = $region37
    $region36: #{tpu_custom_call.1} parent=1 // pred_region
      %134 = vsyncadd [#allocation5], 0
      %s136 = sshll.u32 %s2, 4
      %s137 = int_to_ptr.hbm [resolvable:$true] %s136
      %139 = dma.smem_to_hbm [#allocation8], 16, %s137, [#allocation5]
    $region37: #{tpu_custom_call.1} parent=1 // pred_fallthru
      _
    // Predicated region
    $region38: #{tpu_custom_call.1} parent=1 // pred_check
      _
    $region39: #{tpu_custom_call.1} parent=1 // pred_check_branch
      %141 = sbr.rel (0) target = $region41
    $region40: #{tpu_custom_call.1} parent=1 // pred_region
      %143 = dma.done [#allocation5], 16
    $region41: #{tpu_custom_call.1} parent=1 // pred_fallthru
      _
    %144 = sfence
    %145 = vsyncpa [#allocation4], 1
    %146 = vsyncpa [#allocation7], 1
    %147 = vsyncpa [#allocation5], 1

</llo_original>
